<compile_context>
chip_gen: v7x
topology: tpu7x:2x2x1
jax: 0.10.0
libtpu: 0.0.40
codegen_flags: <defaults>
</compile_context>

<pallas_src>
import functools

import numpy as np

import jax
import jax.numpy as jnp
from jax import lax
from jax.experimental import pallas as pl
from jax.experimental.pallas import tpu as pltpu

NEG_INIT = -1e30    # finite running-max init (below any real logit)


def _round_up(x, m):
    return ((x + m - 1) // m) * m


def _vmem_limit_bytes():
    # Generation-aware scoped-VMEM budget: ~3/4 of physical, capped at 96 MiB.
    cap = 128 * 1024 * 1024
    try:
        info = pltpu.get_tpu_info()
        cap = int(getattr(info, "vmem_capacity_bytes", cap) or cap)
    except Exception:
        pass
    return int(min((cap * 3) // 4, 96 * 1024 * 1024))


VMEM_LIMIT = _vmem_limit_bytes()


def _pick_attn_tiles(npad, vmem_limit):
    # dst-row tile: biggest divisor that still leaves >=2 tiles (v7x megacore).
    tm_cands = [c for c in (512, 256, 128) if npad % c == 0] or [128]
    tm = next((c for c in tm_cands if npad // c >= 2), tm_cands[-1])
    # src-col (reduction) tile: as big as divisibility + VMEM allow.
    tn = next((c for c in (2048, 1024, 512, 256, 128) if npad % c == 0), 128)
    # keep ~3 live f32 [tm,tn] temporaries + int8 adj double-buffer in budget
    while tn > 128 and (tm * tn * (4 * 3) + tm * tn * 2) > vmem_limit // 3:
        tn //= 2
    return tm, tn


def _build_tile_csr(adj, tm, tn):
    """Tile-level CSR of the dense adjacency: for each dst-row tile, the list
    of src-col tiles containing at least one edge (padded with the last valid
    index so skipped grid steps keep the same block index -> no DMA)."""
    a = np.asarray(adj)
    n_i, n_j = a.shape[0] // tm, a.shape[1] // tn
    nz = a.reshape(n_i, tm, n_j, tn).any(axis=(1, 3))
    cnt = nz.sum(axis=1).astype(np.int32)
    kmax = max(int(cnt.max()), 1)
    cols = np.zeros((n_i, kmax), np.int32)
    for i in range(n_i):
        idx = np.nonzero(nz[i])[0].astype(np.int32)
        if idx.size == 0:            # cannot happen with self-loops, but safe
            idx = np.zeros((1,), np.int32)
        cols[i, :idx.size] = idx
        cols[i, idx.size:] = idx[-1]
    return jnp.asarray(cols), jnp.asarray(cnt), kmax


# --------------------------- projection kernel ----------------------------- #
def _gat_proj_kernel(x_ref, wext_ref, vsrc_ref, h_ref, adst_ref, asrc_ref, *,
                     hidden):
    # One bf16 MXU call -> h (cols 0..hidden-1) AND the dst attention logits
    # (column `hidden`; a_dst is folded into W_ext in the wrapper).
    h_ext = jnp.dot(x_ref[...], wext_ref[...],
                    preferred_element_type=jnp.float32)              # [tm, HE]
    h_ref[...] = h_ext.astype(h_ref.dtype)                           # bf16 slab
    adst_ref[...] = h_ext[:, hidden:hidden + 1]                      # [tm, 1]
    # src attention logits as a row [1, tm]: contract the feature dim so the
    # MXU emits the transposed layout directly (no XLU transpose later).
    asrc_ref[...] = lax.dot_general(
        vsrc_ref[...], x_ref[...],
        dimension_numbers=(((1,), (1,)), ((), ())),
        preferred_element_type=jnp.float32)                          # [1, tm]


# ------------------- flash-style masked-softmax attention ------------------ #
def _gat_attn_kernel(cols_ref, cnt_ref, hsrc_ref, adst_ref, asrc_ref, adj_ref,
                     bias_ref, out_ref, m_sc, l_sc, acc_sc, *,
                     hidden, tn, resident):
    i = pl.program_id(0)
    k = pl.program_id(1)

    @pl.when(k == 0)
    def _init():
        m_sc[...] = jnp.full(m_sc.shape, NEG_INIT, jnp.float32)
        l_sc[...] = jnp.zeros(l_sc.shape, jnp.float32)
        acc_sc[...] = jnp.zeros(acc_sc.shape, jnp.float32)

    # Only real (nonzero-adjacency) tiles do work; padded steps reuse the
    # previous block index so their DMAs are elided too.
    @pl.when(k < cnt_ref[i])
    def _compute():
        if resident:
            off = pl.multiple_of(cols_ref[i, k] * tn, tn)
            hsrc = hsrc_ref[pl.ds(off, tn), :]                       # [tn, HE]
        else:
            hsrc = hsrc_ref[...]
        asrc = asrc_ref[...]                                         # [1, tn]

        # e[i, j] = LeakyReLU(<h_i, a_dst> + <h_j, a_src>, slope=0.2)
        e = adst_ref[...] + asrc                                     # [tm, tn]
        e = jnp.maximum(e, 0.2 * e)                                  # LeakyReLU

        # Online softmax over incoming edges; mask by multiplying after the
        # exp (softmax is shift-invariant, so the max over all entries is a
        # valid stabilizer; masked entries contribute exactly 0).
        m_prev = m_sc[...]
        m_new = jnp.maximum(m_prev, jnp.max(e, axis=-1, keepdims=True))
        scale = jnp.exp(m_prev - m_new)
        p = jnp.exp(e - m_new) * adj_ref[...].astype(jnp.float32)
        l_sc[...] = scale * l_sc[...] + jnp.sum(p, axis=-1, keepdims=True)
        acc_sc[...] = scale * acc_sc[...] + jnp.dot(
            p.astype(jnp.bfloat16), hsrc,
            preferred_element_type=jnp.float32)                      # bf16 MXU
        m_sc[...] = m_new

    @pl.when(k == pl.num_programs(1) - 1)
    def _finalize():
        inv_l = pl.reciprocal(l_sc[...], approx=False)   # exact; once per tile
        out = acc_sc[...] * inv_l + bias_ref[...]
        out = jnp.maximum(out, 0.0)                                  # fused ReLU
        # keep the lane-padded slab exactly zero beyond `hidden`
        lane = lax.broadcasted_iota(jnp.int32, out.shape, 1)
        out_ref[...] = jnp.where(lane < hidden, out, 0.0).astype(out_ref.dtype)


def gat_layer(x_slab, wext, vsrc, bias, adj, cols, cnt, kmax, *, tm, tn,
              hidden):
    npad, fp = x_slab.shape
    he = wext.shape[1]

    # ---- 1) projection: h, dst logits, src logits (computed once per layer)
    h, adst, asrc = pl.pallas_call(
        functools.partial(_gat_proj_kernel, hidden=hidden),
        out_shape=(jax.ShapeDtypeStruct((npad, he), jnp.bfloat16),
                   jax.ShapeDtypeStruct((npad, 1), jnp.float32),
                   jax.ShapeDtypeStruct((1, npad), jnp.float32)),
        grid=(npad // tm,),
        in_specs=[pl.BlockSpec((tm, fp), lambda i: (i, 0)),
                  pl.BlockSpec((fp, he), lambda i: (0, 0)),
                  pl.BlockSpec((1, fp), lambda i: (0, 0))],
        out_specs=[pl.BlockSpec((tm, he), lambda i: (i, 0)),
                   pl.BlockSpec((tm, 1), lambda i: (i, 0)),
                   pl.BlockSpec((1, tm), lambda i: (0, i))],
        compiler_params=pltpu.CompilerParams(
            dimension_semantics=("parallel",),
            vmem_limit_bytes=VMEM_LIMIT),
    )(x_slab, wext, vsrc)

    # ---- 2) attention: h kept VMEM-resident when it fits the budget
    resident = (npad * he * 2) <= max(VMEM_LIMIT // 4, 4 * 1024 * 1024)
    if resident:
        h_spec = pl.BlockSpec((npad, he), lambda i, k, c, n: (0, 0))
    else:
        h_spec = pl.BlockSpec((tn, he), lambda i, k, c, n: (c[i, k], 0))

    grid_spec = pltpu.PrefetchScalarGridSpec(
        num_scalar_prefetch=2,                      # cols [n_i,kmax], cnt [n_i]
        grid=(npad // tm, kmax),
        in_specs=[h_spec,                                            # h (src)
                  pl.BlockSpec((tm, 1), lambda i, k, c, n: (i, 0)),  # dst logit
                  pl.BlockSpec((1, tn), lambda i, k, c, n: (0, c[i, k])),  # src
                  pl.BlockSpec((tm, tn), lambda i, k, c, n: (i, c[i, k])),  # adj
                  pl.BlockSpec((1, he), lambda i, k, c, n: (0, 0))],  # bias
        out_specs=pl.BlockSpec((tm, he), lambda i, k, c, n: (i, 0)),
        scratch_shapes=[pltpu.VMEM((tm, 1), jnp.float32),            # m
                        pltpu.VMEM((tm, 1), jnp.float32),            # l
                        pltpu.VMEM((tm, he), jnp.float32)])          # acc

    return pl.pallas_call(
        functools.partial(_gat_attn_kernel, hidden=hidden, tn=tn,
                          resident=resident),
        out_shape=jax.ShapeDtypeStruct((npad, he), jnp.bfloat16),
        grid_spec=grid_spec,
        compiler_params=pltpu.CompilerParams(
            dimension_semantics=("parallel", "arbitrary"),
            vmem_limit_bytes=VMEM_LIMIT),
    )(cols, cnt, h, adst, asrc, adj, bias)


# ------------------------ pooling + MLP head kernel ------------------------ #
def _head_kernel(x_ref, pool_ref, w1T_ref, b1_ref, w2T_ref, b2_ref, out_ref,
                 pooled_sc):
    i = pl.program_id(0)

    @pl.when(i == 0)
    def _init():
        pooled_sc[...] = jnp.zeros(pooled_sc.shape, jnp.float32)

    # global_mean_pool, tiled over node chunks: [B, tp] @ [tp, HE] -> [B, HE]
    pooled_sc[...] += jnp.dot(pool_ref[...].astype(jnp.bfloat16), x_ref[...],
                              preferred_element_type=jnp.float32)

    @pl.when(i == pl.num_programs(0) - 1)
    def _finalize():
        h1 = jnp.dot(pooled_sc[...].astype(jnp.bfloat16), w1T_ref[...],
                     preferred_element_type=jnp.float32) + b1_ref[...]
        h1 = jnp.maximum(h1, 0.0)
        # TODO(synk): F.dropout(p=0.5) is eval-mode identity (inference only).
        logits = jnp.dot(h1.astype(jnp.bfloat16), w2T_ref[...],
                         preferred_element_type=jnp.float32) + b2_ref[...]
        z = logits - jnp.max(logits, axis=-1, keepdims=True)
        out_ref[...] = z - jnp.log(jnp.sum(jnp.exp(z), axis=-1, keepdims=True))


def gat_head(x_slab, pool, w1T, b1, w2T, b2):
    npad, he = x_slab.shape
    B = pool.shape[0]
    C = w2T.shape[1]
    tp = next((c for c in (2048, 1024, 512, 256, 128) if npad % c == 0), 128)
    return pl.pallas_call(
        _head_kernel,
        out_shape=jax.ShapeDtypeStruct((B, C), jnp.float32),
        grid=(npad // tp,),
        in_specs=[pl.BlockSpec((tp, he), lambda i: (i, 0)),
                  pl.BlockSpec((B, tp), lambda i: (0, i)),
                  pl.BlockSpec((he, he), lambda i: (0, 0)),
                  pl.BlockSpec((1, he), lambda i: (0, 0)),
                  pl.BlockSpec((he, C), lambda i: (0, 0)),
                  pl.BlockSpec((1, C), lambda i: (0, 0))],
        out_specs=pl.BlockSpec((B, C), lambda i: (0, 0)),
        scratch_shapes=[pltpu.VMEM((B, he), jnp.float32)],
        compiler_params=pltpu.CompilerParams(
            dimension_semantics=("arbitrary",),
            vmem_limit_bytes=VMEM_LIMIT),
    )(x_slab, pool, w1T, b1, w2T, b2)


# ------------------------------- full model -------------------------------- #
def gat_forward(params, x_slab, adj, pool):
    hidden = params["hidden"]
    npad = x_slab.shape[0]
    tm, tn = _pick_attn_tiles(npad, VMEM_LIMIT)
    # adjacency (and its tile-level CSR) is shared by every layer
    cols, cnt, kmax = _build_tile_csr(adj, tm, tn)
    for wext, vsrc, bias in [params["conv1"]] + params["convs"]:
        x_slab = gat_layer(x_slab, wext, vsrc, bias, adj, cols, cnt, kmax,
                           tm=tm, tn=tn, hidden=hidden)
    w1T, b1 = params["lin1"]
    w2T, b2 = params["lin2"]
    return gat_head(x_slab, pool, w1T, b1, w2T, b2)


def init_params(key, num_features, hidden, num_classes, num_layers, *, fp0, he):
    def conv_params(k, fan_in, in_width):
        k1, k2, k3 = jax.random.split(k, 3)
        w = 0.1 * jax.random.normal(k1, (hidden, fan_in), jnp.float32)  # [out, in]
        a_src = 0.1 * jax.random.normal(k2, (1, hidden), jnp.float32)
        a_dst = 0.1 * jax.random.normal(k3, (1, hidden), jnp.float32)
        wT = w.T                                                        # [in, out]
        # fold a_dst into an extra weight column; fold a_src into a row vector
        wext = jnp.zeros((in_width, he), jnp.float32)
        wext = wext.at[:fan_in, :hidden].set(wT)
        wext = wext.at[:fan_in, hidden].set((wT @ a_dst.T)[:, 0])
        vsrc = jnp.zeros((1, in_width), jnp.float32)
        vsrc = vsrc.at[0, :fan_in].set((wT @ a_src.T)[:, 0])
        bias = jnp.zeros((1, he), jnp.float32)
        return wext.astype(jnp.bfloat16), vsrc.astype(jnp.bfloat16), bias

    keys = jax.random.split(key, num_layers + 1)
    params = {
        "hidden": hidden,
        "conv1": conv_params(keys[0], num_features, fp0),
        "convs": [conv_params(keys[i + 1], hidden, he)
                  for i in range(num_layers - 1)],
    }
    k1, k2 = jax.random.split(keys[-1])
    w1 = 0.1 * jax.random.normal(k1, (hidden, hidden), jnp.float32)
    w2 = 0.1 * jax.random.normal(k2, (num_classes, hidden), jnp.float32)
    w1T = jnp.zeros((he, he), jnp.float32).at[:hidden, :hidden].set(w1.T)
    w2T = jnp.zeros((he, num_classes), jnp.float32).at[:hidden, :].set(w2.T)
    params["lin1"] = (w1T.astype(jnp.bfloat16), jnp.zeros((1, he), jnp.float32))
    params["lin2"] = (w2T.astype(jnp.bfloat16),
                      jnp.zeros((1, num_classes), jnp.float32))
    return params


if __name__ == "__main__":
    # Small synthetic "dataset": 2 graphs of 8 nodes each (ring graphs).
    NUM_FEATURES, HIDDEN, NUM_CLASSES, NUM_LAYERS = 16, 32, 8, 2
    N_PER_GRAPH, NUM_GRAPHS = 8, 2
    N = N_PER_GRAPH * NUM_GRAPHS

    FP0 = _round_up(NUM_FEATURES, 128)       # layer-1 input slab width
    HE = _round_up(HIDDEN + 1, 128)          # inter-layer (lane-dense) slab width
    NPAD = _round_up(N, 128)                 # padded node count

    key = jax.random.PRNGKey(0)
    k_x, k_p = jax.random.split(key)

    x = jax.random.normal(k_x, (N, NUM_FEATURES), jnp.float32)
    batch = jnp.concatenate([jnp.full((N_PER_GRAPH,), g, jnp.int32)
                             for g in range(NUM_GRAPHS)])

    # edge_index [2, E]: bidirectional ring within each graph.
    src, dst = [], []
    for g in range(NUM_GRAPHS):
        off = g * N_PER_GRAPH
        for i in range(N_PER_GRAPH):
            a, b = off + i, off + (i + 1) % N_PER_GRAPH
            src += [a, b]
            dst += [b, a]
    edge_index = jnp.array([src, dst], jnp.int32)

    # Dense int8 adjacency adj[dst, src] = 1, plus self loops (GATConv default).
    adj = jnp.zeros((NPAD, NPAD), jnp.int8)
    adj = adj.at[edge_index[1], edge_index[0]].set(1)
    adj = jnp.maximum(adj, jnp.eye(NPAD, dtype=jnp.int8))

    # Mean-pool matrix [B, NPAD]; padded nodes get zero weight.
    batch_pad = jnp.full((NPAD,), -1, jnp.int32).at[:N].set(batch)
    onehot = (batch_pad[None, :] == jnp.arange(NUM_GRAPHS)[:, None]).astype(jnp.float32)
    pool = onehot / jnp.sum(onehot, axis=1, keepdims=True)

    # Lane-dense, zero-padded bf16 feature slab.
    x_slab = jnp.zeros((NPAD, FP0), jnp.float32).at[:N, :NUM_FEATURES].set(x)
    x_slab = x_slab.astype(jnp.bfloat16)

    params = init_params(k_p, NUM_FEATURES, HIDDEN, NUM_CLASSES, NUM_LAYERS,
                         fp0=FP0, he=HE)

    out = gat_forward(params, x_slab, adj, pool)      # [2, 8] log-probs
    jax.block_until_ready(out)
    assert out.shape == (NUM_GRAPHS, NUM_CLASSES)
    # log_softmax sanity: rows sum to ~1 in prob space, and are finite.
    assert jnp.allclose(jnp.sum(jnp.exp(out), axis=-1), 1.0, atol=1e-3)
    assert bool(jnp.all(jnp.isfinite(out)))
    print("KERNEL_OK")
</pallas_src>

<mosaic_0001>
module attributes {stable_mosaic.version = 11 : i64} {
  func.func @_gat_proj_kernel(%arg0: i32, %arg1: memref<128x128xbf16, #tpu.memory_space<vmem>>, %arg2: memref<128x128xbf16, #tpu.memory_space<vmem>>, %arg3: memref<1x128xbf16, #tpu.memory_space<vmem>>, %arg4: memref<128x128xbf16, #tpu.memory_space<vmem>>, %arg5: memref<128x1xf32, #tpu.memory_space<vmem>>, %arg6: memref<1x128xf32, #tpu.memory_space<vmem>>) attributes {dimension_semantics = [#tpu.dimension_semantics<parallel>], iteration_bounds = array<i64: 1>, scalar_prefetch = 0 : i64, scratch_operands = 0 : i64, tpu.core_type = #tpu.core_type<tc>, window_params = [{transform_indices = @transform_0, window_bounds = array<i64: 128, 128>}, {pipeline_mode = #tpu.pipeline_mode<synchronous>, transform_indices = @transform_1, window_bounds = array<i64: 128, 128>}, {pipeline_mode = #tpu.pipeline_mode<synchronous>, transform_indices = @transform_2, window_bounds = array<i64: 1, 128>}, {transform_indices = @transform_3, window_bounds = array<i64: 128, 128>}, {transform_indices = @transform_4, window_bounds = array<i64: 128, 1>}, {transform_indices = @transform_5, window_bounds = array<i64: 1, 128>}]} {
    %c0 = arith.constant 0 : index
    %c0_0 = arith.constant 0 : index
    %0 = vector.load %arg1[%c0, %c0_0] : memref<128x128xbf16, #tpu.memory_space<vmem>>, vector<128x128xbf16>
    %c0_1 = arith.constant 0 : index
    %c0_2 = arith.constant 0 : index
    %1 = vector.load %arg2[%c0_1, %c0_2] : memref<128x128xbf16, #tpu.memory_space<vmem>>, vector<128x128xbf16>
    %cst = arith.constant dense<0.000000e+00> : vector<128x128xf32>
    %2 = tpu.matmul %0, %1, %cst {dimension_numbers = #tpu.dot_dimension_numbers<[1], [0], [0], [1], [0, 0, 1, 1], [], []>} : vector<128x128xbf16>, vector<128x128xbf16>, vector<128x128xf32> -> vector<128x128xf32>
    %3 = arith.truncf %2 : vector<128x128xf32> to vector<128x128xbf16>
    %c0_3 = arith.constant 0 : index
    %c0_4 = arith.constant 0 : index
    %4 = vector.load %arg4[%c0_3, %c0_4] : memref<128x128xbf16, #tpu.memory_space<vmem>>, vector<128x128xbf16>
    tpu.vector_store %arg4[%c0_3, %c0_4], %3 {strides = array<i32>} : memref<128x128xbf16, #tpu.memory_space<vmem>>, vector<128x128xbf16>,
    %5 = vector.extract_strided_slice %2 {offsets = [0, 32], sizes = [128, 1], strides = [1, 1]} : vector<128x128xf32> to vector<128x1xf32>
    %c0_5 = arith.constant 0 : index
    %c0_6 = arith.constant 0 : index
    %6 = vector.load %arg5[%c0_5, %c0_6] : memref<128x1xf32, #tpu.memory_space<vmem>>, vector<128x1xf32>
    tpu.vector_store %arg5[%c0_5, %c0_6], %5 {strides = array<i32>} : memref<128x1xf32, #tpu.memory_space<vmem>>, vector<128x1xf32>,
    %c0_7 = arith.constant 0 : index
    %c0_8 = arith.constant 0 : index
    %7 = vector.load %arg3[%c0_7, %c0_8] : memref<1x128xbf16, #tpu.memory_space<vmem>>, vector<1x128xbf16>
    %c0_9 = arith.constant 0 : index
    %c0_10 = arith.constant 0 : index
    %8 = vector.load %arg1[%c0_9, %c0_10] : memref<128x128xbf16, #tpu.memory_space<vmem>>, vector<128x128xbf16>
    %cst_11 = arith.constant dense<0.000000e+00> : vector<1x128xf32>
    %9 = tpu.matmul %7, %8, %cst_11 {dimension_numbers = #tpu.dot_dimension_numbers<[1], [1], [0], [0], [0, 0, 1, 0], [], []>} : vector<1x128xbf16>, vector<128x128xbf16>, vector<1x128xf32> -> vector<1x128xf32>
    %c0_12 = arith.constant 0 : index
    %c0_13 = arith.constant 0 : index
    %10 = vector.load %arg6[%c0_12, %c0_13] : memref<1x128xf32, #tpu.memory_space<vmem>>, vector<1x128xf32>
    tpu.vector_store %arg6[%c0_12, %c0_13], %9 {strides = array<i32>} : memref<1x128xf32, #tpu.memory_space<vmem>>, vector<1x128xf32>,
    return
  }
  func.func @transform_0(%arg0: i32) -> (i32, i32) {
    %c0_i32 = arith.constant 0 : i32
    %c0_i32_0 = arith.constant 0 : i32
    return %arg0, %c0_i32 : i32, i32
  }
  func.func @transform_1(%arg0: i32) -> (i32, i32) {
    %c0_i32 = arith.constant 0 : i32
    %c0_i32_0 = arith.constant 0 : i32
    %c0_i32_1 = arith.constant 0 : i32
    return %c0_i32, %c0_i32_0 : i32, i32
  }
  func.func @transform_2(%arg0: i32) -> (i32, i32) {
    %c0_i32 = arith.constant 0 : i32
    %c0_i32_0 = arith.constant 0 : i32
    %c0_i32_1 = arith.constant 0 : i32
    return %c0_i32, %c0_i32_0 : i32, i32
  }
  func.func @transform_3(%arg0: i32) -> (i32, i32) {
    %c0_i32 = arith.constant 0 : i32
    %c0_i32_0 = arith.constant 0 : i32
    return %arg0, %c0_i32 : i32, i32
  }
  func.func @transform_4(%arg0: i32) -> (i32, i32) {
    %c0_i32 = arith.constant 0 : i32
    %c0_i32_0 = arith.constant 0 : i32
    return %arg0, %c0_i32 : i32, i32
  }
  func.func @transform_5(%arg0: i32) -> (i32, i32) {
    %c0_i32 = arith.constant 0 : i32
    %c0_i32_0 = arith.constant 0 : i32
    return %c0_i32, %arg0 : i32, i32
  }
}

</mosaic_0001>

<llo_original>
// kernel: tpu_custom_call.1
$region0: #{tpu_custom_call.1}
  #allocation0 [shape = 'u32[]', space=smem, size = 0x4, offset = 0x4, fixed_abs, tag = 'smem constant byte address 0x4 - core index']
  #allocation1 [shape = 'u32[144,128]{1,0:T(1,128)}', space=vmem, size = 0x12000, scoped, tag = 'internal scratch']
  %s0 = inlined_call_operand.hbm [shape: bf16[128,128], index: 0, kind: input, shape index: {}]
  %s1 = inlined_call_operand.hbm [shape: bf16[128,128], index: 1, kind: input, shape index: {}]
  %s2 = inlined_call_operand.hbm [shape: bf16[1,128], index: 2, kind: input, shape index: {}]
  %s3 = inlined_call_operand.hbm [shape: bf16[128,128], index: 3, kind: output, shape index: {0}]
  %s4 = inlined_call_operand.hbm [shape: f32[128,1], index: 4, kind: output, shape index: {1}]
  %s5 = inlined_call_operand.hbm [shape: f32[1,128], index: 5, kind: output, shape index: {2}]
  %6 = xla_tuple %s3, %s4, %s5
  %s7 = sld [smem:[#allocation0]]
  $region50: #{tpu_custom_call.1} parent=0
    _
  %s9 = ssub.s32 1, %s7
  %s10 = scalar_select 0, %s9, %s7
  $region1: #{tpu_custom_call.1} parent=0
    #allocation2 [shape = 'u8[32768]{0}', space=vmem, size = 0x8000, scoped, tag = 'input window, operand 0, single buffered']
    #allocation3 [shape = 's32[1]{0}', space=sflag, size = 0x4, scoped, tag = 'scoped memory for tpu_custom_call.1']
    #allocation4 [shape = 's32[1]{0}', space=sflag, size = 0x4, scoped, tag = 'scoped memory for tpu_custom_call.1']
    #allocation5 [shape = 'u8[32768]{0}', space=vmem, size = 0x8000, scoped, tag = 'input window, operand 1, single buffered']
    #allocation6 [shape = 's32[1]{0}', space=sflag, size = 0x4, scoped, tag = 'scoped memory for tpu_custom_call.1']
    #allocation7 [shape = 'u8[512]{0}', space=vmem, size = 0x400, scoped, tag = 'input window, operand 2, single buffered']
    #allocation8 [shape = 'u8[32768]{0}', space=vmem, size = 0x8000, scoped, tag = 'output window, operand 0, single buffered']
    #allocation9 [shape = 'u8[65536]{0}', space=vmem, size = 0x10000, scoped, tag = 'output window, operand 1, single buffered']
    #allocation10 [shape = 's32[1]{0}', space=sflag, size = 0x4, scoped, tag = 'scoped memory for tpu_custom_call.1']
    #allocation11 [shape = 'u8[512]{0}', space=vmem, size = 0x400, scoped, tag = 'output window, operand 2, single buffered']
    %11 = vsyncpa [#allocation3], 0
    %12 = vsyncpa [#allocation6], 0
    %13 = vsyncpa [#allocation4], 0
    %14 = vsyncpa [#allocation10], 0
    // Predicated region
    $region2: #{tpu_custom_call.1} parent=1 // pred_check
      _
    $region3: #{tpu_custom_call.1} parent=1 // pred_check_branch
      %16 = sbr.rel (0) target = $region5
    $region4: #{tpu_custom_call.1} parent=1 // pred_region
      %s18 = ssub.s32 1024, 1024
      %19 = vsyncadd [#allocation3], %s18
      %s20 = sshll.u32 [#allocation2], 4
      %s21 = int_to_ptr.vmem [resolvable:$true] %s20
      %26 = dma.hbm_to_vmem [thread:$0]  %s0, 1024, %s21, [#allocation3], 64, 64, 4
    $region5: #{tpu_custom_call.1} parent=1 // pred_fallthru
      _
    // Predicated region
    $region6: #{tpu_custom_call.1} parent=1 // pred_check
      _
    $region7: #{tpu_custom_call.1} parent=1 // pred_check_branch
      %28 = sbr.rel (0) target = $region9
    $region8: #{tpu_custom_call.1} parent=1 // pred_region
      %s30 = ssub.s32 1024, 1024
      %31 = vsyncadd [#allocation6], %s30
      %s32 = sshll.u32 [#allocation5], 4
      %s33 = int_to_ptr.vmem [resolvable:$true] %s32
      %38 = dma.hbm_to_vmem [thread:$0]  %s1, 1024, %s33, [#allocation6], 64, 64, 4
    $region9: #{tpu_custom_call.1} parent=1 // pred_fallthru
      _
    // Predicated region
    $region10: #{tpu_custom_call.1} parent=1 // pred_check
      _
    $region11: #{tpu_custom_call.1} parent=1 // pred_check_branch
      %40 = sbr.rel (0) target = $region13
    $region12: #{tpu_custom_call.1} parent=1 // pred_region
      %s42 = ssub.s32 16, 16
      %43 = vsyncadd [#allocation6], %s42
      %s45 = sshll.u32 [#allocation7], 4
      %s46 = int_to_ptr.vmem [resolvable:$true] %s45
      %48 = dma.hbm_to_vmem [thread:$0]  %s2, 16, %s46, [#allocation6]
    $region13: #{tpu_custom_call.1} parent=1 // pred_fallthru
      _
    // Predicated region
    $region14: #{tpu_custom_call.1} parent=1 // pred_check
      _
    $region15: #{tpu_custom_call.1} parent=1 // pred_check_branch
      %50 = sbr.rel (0) target = $region17
    $region16: #{tpu_custom_call.1} parent=1 // pred_region
      %51 = dma.done [#allocation3], 1024
    $region17: #{tpu_custom_call.1} parent=1 // pred_fallthru
      _
    // Predicated region
    $region18: #{tpu_custom_call.1} parent=1 // pred_check
      _
    $region19: #{tpu_custom_call.1} parent=1 // pred_check_branch
      %53 = sbr.rel (0) target = $region21
    $region20: #{tpu_custom_call.1} parent=1 // pred_region
      %54 = dma.done [#allocation6], 1024
    $region21: #{tpu_custom_call.1} parent=1 // pred_fallthru
      _
    // Predicated region
    $region22: #{tpu_custom_call.1} parent=1 // pred_check
      _
    $region23: #{tpu_custom_call.1} parent=1 // pred_check_branch
      %56 = sbr.rel (0) target = $region25
    $region24: #{tpu_custom_call.1} parent=1 // pred_region
      %57 = dma.done [#allocation6], 16
    $region25: #{tpu_custom_call.1} parent=1 // pred_fallthru
      _
    %v59 = vld [vmem:[#allocation2] sm:$0xf]
    %v60 = vld [vmem:[#allocation2 + $0x4] sm:$0xf]
    %v61 = vld [vmem:[#allocation2 + $0x8] sm:$0xf]
    %v62 = vld [vmem:[#allocation2 + $0xc] sm:$0xf]
    %v63 = vld [vmem:[#allocation2 + $0x10] sm:$0xf]
    %v64 = vld [vmem:[#allocation2 + $0x14] sm:$0xf]
    %v65 = vld [vmem:[#allocation2 + $0x18] sm:$0xf]
    %v66 = vld [vmem:[#allocation2 + $0x1c] sm:$0xf]
    %v67 = vld [vmem:[#allocation2 + $0x20] sm:$0xf]
    %v68 = vld [vmem:[#allocation2 + $0x24] sm:$0xf]
    %v69 = vld [vmem:[#allocation2 + $0x28] sm:$0xf]
    %v70 = vld [vmem:[#allocation2 + $0x2c] sm:$0xf]
    %v71 = vld [vmem:[#allocation2 + $0x30] sm:$0xf]
    %v72 = vld [vmem:[#allocation2 + $0x34] sm:$0xf]
    %v73 = vld [vmem:[#allocation2 + $0x38] sm:$0xf]
    %v74 = vld [vmem:[#allocation2 + $0x3c] sm:$0xf]
    %v75 = vld [vmem:[#allocation5] sm:$0xf]
    %v76 = vld [vmem:[#allocation5 + $0x4] sm:$0xf]
    %v77 = vld [vmem:[#allocation5 + $0x8] sm:$0xf]
    %v78 = vld [vmem:[#allocation5 + $0xc] sm:$0xf]
    %v79 = vld [vmem:[#allocation5 + $0x10] sm:$0xf]
    %v80 = vld [vmem:[#allocation5 + $0x14] sm:$0xf]
    %v81 = vld [vmem:[#allocation5 + $0x18] sm:$0xf]
    %v82 = vld [vmem:[#allocation5 + $0x1c] sm:$0xf]
    %v83 = vld [vmem:[#allocation5 + $0x20] sm:$0xf]
    %v84 = vld [vmem:[#allocation5 + $0x24] sm:$0xf]
    %v85 = vld [vmem:[#allocation5 + $0x28] sm:$0xf]
    %v86 = vld [vmem:[#allocation5 + $0x2c] sm:$0xf]
    %v87 = vld [vmem:[#allocation5 + $0x30] sm:$0xf]
    %v88 = vld [vmem:[#allocation5 + $0x34] sm:$0xf]
    %v89 = vld [vmem:[#allocation5 + $0x38] sm:$0xf]
    %v90 = vld [vmem:[#allocation5 + $0x3c] sm:$0xf]
    %v107 = vunpack.c.l.b16 %v59
    %v108 = vunpack.c.l.b16 %v60
    %v109 = vunpack.c.l.b16 %v61
    %v110 = vunpack.c.l.b16 %v62
    %v111 = vunpack.c.l.b16 %v63
    %v112 = vunpack.c.l.b16 %v64
    %v113 = vunpack.c.l.b16 %v65
    %v114 = vunpack.c.l.b16 %v66
    %v115 = vunpack.c.l.b16 %v67
    %v116 = vunpack.c.l.b16 %v68
    %v117 = vunpack.c.l.b16 %v69
    %v118 = vunpack.c.l.b16 %v70
    %v119 = vunpack.c.l.b16 %v71
    %v120 = vunpack.c.l.b16 %v72
    %v121 = vunpack.c.l.b16 %v73
    %v122 = vunpack.c.l.b16 %v74
    %v123 = vpack.c.b16 %v108, %v107
    %v124 = vpack.c.b16 %v110, %v109
    %v125 = vpack.c.b16 %v112, %v111
    %v126 = vpack.c.b16 %v114, %v113
    %v127 = vpack.c.b16 %v116, %v115
    %v128 = vpack.c.b16 %v118, %v117
    %v129 = vpack.c.b16 %v120, %v119
    %v130 = vpack.c.b16 %v122, %v121
    %v155 = vunpack.c.l.b16 %v75
    %v156 = vunpack.c.l.b16 %v76
    %v157 = vunpack.c.l.b16 %v77
    %v158 = vunpack.c.l.b16 %v78
    %v159 = vunpack.c.l.b16 %v79
    %v160 = vunpack.c.l.b16 %v80
    %v161 = vunpack.c.l.b16 %v81
    %v162 = vunpack.c.l.b16 %v82
    %v163 = vunpack.c.l.b16 %v83
    %v164 = vunpack.c.l.b16 %v84
    %v165 = vunpack.c.l.b16 %v85
    %v166 = vunpack.c.l.b16 %v86
    %v167 = vunpack.c.l.b16 %v87
    %v168 = vunpack.c.l.b16 %v88
    %v169 = vunpack.c.l.b16 %v89
    %v170 = vunpack.c.l.b16 %v90
    %v171 = vpack.c.b16 %v156, %v155
    %v172 = vpack.c.b16 %v158, %v157
    %v173 = vpack.c.b16 %v160, %v159
    %v174 = vpack.c.b16 %v162, %v161
    %v175 = vpack.c.b16 %v164, %v163
    %v176 = vpack.c.b16 %v166, %v165
    %v177 = vpack.c.b16 %v168, %v167
    %v178 = vpack.c.b16 %v170, %v169
    %187 = vmatprep.subr.bf16.mxu0 0
    %188 = vmatpush1.bf16.msra.mxu0 %v171
    %189 = vmatprep.subr.bf16.mxu0 0
    %190 = vmatpush1.bf16.msra.mxu0 %v172
    %191 = vmatprep.subr.bf16.mxu0 0
    %192 = vmatpush1.bf16.msra.mxu0 %v173
    %193 = vmatprep.subr.bf16.mxu0 0
    %194 = vmatpush1.bf16.msra.mxu0 %v174
    %195 = vmatprep.subr.bf16.mxu0 0
    %196 = vmatpush1.bf16.msra.mxu0 %v175
    %197 = vmatprep.subr.bf16.mxu0 0
    %198 = vmatpush1.bf16.msra.mxu0 %v176
    %199 = vmatprep.subr.bf16.mxu0 0
    %200 = vmatpush1.bf16.msra.mxu0 %v177
    %201 = vmatprep.subr.bf16.mxu0 0
    %202 = vmatpush1.bf16.msra.mxu0 %v178
    %203 = vmatprep.subr.bf16.mxu0 0
    %204 = vmatpush1.bf16.msra.mxu0 0
    %205 = vmatprep.subr.bf16.mxu0 0
    %206 = vmatpush1.bf16.msra.mxu0 0
    %207 = vmatprep.subr.bf16.mxu0 0
    %208 = vmatpush1.bf16.msra.mxu0 0
    %209 = vmatprep.subr.bf16.mxu0 0
    %210 = vmatpush1.bf16.msra.mxu0 0
    %211 = vmatprep.subr.bf16.mxu0 0
    %212 = vmatpush1.bf16.msra.mxu0 0
    %213 = vmatprep.subr.bf16.mxu0 0
    %214 = vmatpush1.bf16.msra.mxu0 0
    %215 = vmatprep.subr.bf16.mxu0 0
    %216 = vmatpush1.bf16.msra.mxu0 0
    %217 = vmatprep.subr.bf16.mxu0 0
    %218 = vmatpush1.bf16.msra.mxu0 0
    %219 = vmatprep.mubr.bf16.mxu0 0
    %220 = vmatmul.mubr.bf16.gmra.mrb[0].mxu0 %v123
    %v221 = vpop.f32.mrb[0].mxu0
    %v222 = vadd.f32 0.0, %v221
    %v223 = vpop.f32.mrb[0].mxu0
    %v224 = vpop.f32.mrb[0].mxu0
    %v225 = vadd.f32 0.0, %v224
    %v226 = vpop.f32.mrb[0].mxu0
    %227 = vmatprep.mubr.bf16.mxu0 0
    %228 = vmatmul.mubr.bf16.gmra.mrb[0].mxu0 %v124
    %v229 = vpop.f32.mrb[0].mxu0
    %v230 = vadd.f32 0.0, %v229
    %v231 = vpop.f32.mrb[0].mxu0
    %v232 = vpop.f32.mrb[0].mxu0
    %v233 = vadd.f32 0.0, %v232
    %v234 = vpop.f32.mrb[0].mxu0
    %235 = vmatprep.mubr.bf16.mxu0 0
    %236 = vmatmul.mubr.bf16.gmra.mrb[0].mxu0 %v125
    %v237 = vpop.f32.mrb[0].mxu0
    %v238 = vadd.f32 0.0, %v237
    %v239 = vpop.f32.mrb[0].mxu0
    %v240 = vpop.f32.mrb[0].mxu0
    %v241 = vadd.f32 0.0, %v240
    %v242 = vpop.f32.mrb[0].mxu0
    %243 = vmatprep.mubr.bf16.mxu0 0
    %244 = vmatmul.mubr.bf16.gmra.mrb[0].mxu0 %v126
    %v245 = vpop.f32.mrb[0].mxu0
    %v246 = vadd.f32 0.0, %v245
    %v247 = vpop.f32.mrb[0].mxu0
    %v248 = vpop.f32.mrb[0].mxu0
    %v249 = vadd.f32 0.0, %v248
    %v250 = vpop.f32.mrb[0].mxu0
    %251 = vmatprep.mubr.bf16.mxu0 0
    %252 = vmatmul.mubr.bf16.gmra.mrb[0].mxu0 %v127
    %v253 = vpop.f32.mrb[0].mxu0
    %v254 = vadd.f32 0.0, %v253
    %v255 = vpop.f32.mrb[0].mxu0
    %v256 = vpop.f32.mrb[0].mxu0
    %v257 = vadd.f32 0.0, %v256
    %v258 = vpop.f32.mrb[0].mxu0
    %259 = vmatprep.mubr.bf16.mxu0 0
    %260 = vmatmul.mubr.bf16.gmra.mrb[0].mxu0 %v128
    %v261 = vpop.f32.mrb[0].mxu0
    %v262 = vadd.f32 0.0, %v261
    %v263 = vpop.f32.mrb[0].mxu0
    %v264 = vpop.f32.mrb[0].mxu0
    %v265 = vadd.f32 0.0, %v264
    %v266 = vpop.f32.mrb[0].mxu0
    %267 = vmatprep.mubr.bf16.mxu0 0
    %268 = vmatmul.mubr.bf16.gmra.mrb[0].mxu0 %v129
    %v269 = vpop.f32.mrb[0].mxu0
    %v270 = vadd.f32 0.0, %v269
    %v271 = vpop.f32.mrb[0].mxu0
    %v272 = vpop.f32.mrb[0].mxu0
    %v273 = vadd.f32 0.0, %v272
    %v274 = vpop.f32.mrb[0].mxu0
    %275 = vmatprep.mubr.bf16.mxu0 0
    %276 = vmatmul.mubr.bf16.gmra.mrb[0].mxu0 %v130
    %v277 = vpop.f32.mrb[0].mxu0
    %v278 = vadd.f32 0.0, %v277
    %v279 = vpop.f32.mrb[0].mxu0
    %v280 = vpop.f32.mrb[0].mxu0
    %v281 = vadd.f32 0.0, %v280
    %v282 = vpop.f32.mrb[0].mxu0
    %283 = vdwg.mxu0
    %v284 = vpack.c.bf16 %v225, %v222
    %v285 = vpack.c.bf16 %v233, %v230
    %v286 = vpack.c.bf16 %v241, %v238
    %v287 = vpack.c.bf16 %v249, %v246
    %v288 = vpack.c.bf16 %v257, %v254
    %v289 = vpack.c.bf16 %v265, %v262
    %v290 = vpack.c.bf16 %v273, %v270
    %v291 = vpack.c.bf16 %v281, %v278
    %v300 = vunpack.c.l.b16 %v284
    %v301 = vunpack.c.h.b16 %v284
    %v302 = vunpack.c.l.b16 %v285
    %v303 = vunpack.c.h.b16 %v285
    %v304 = vunpack.c.l.b16 %v286
    %v305 = vunpack.c.h.b16 %v286
    %v306 = vunpack.c.l.b16 %v287
    %v307 = vunpack.c.h.b16 %v287
    %v308 = vunpack.c.l.b16 %v288
    %v309 = vunpack.c.h.b16 %v288
    %v310 = vunpack.c.l.b16 %v289
    %v311 = vunpack.c.h.b16 %v289
    %v312 = vunpack.c.l.b16 %v290
    %v313 = vunpack.c.h.b16 %v290
    %v314 = vunpack.c.l.b16 %v291
    %v315 = vunpack.c.h.b16 %v291
    %v316 = vpack.c.b16 %v300, %v300
    %v317 = vpack.c.b16 %v301, %v301
    %v318 = vpack.c.b16 %v302, %v302
    %v319 = vpack.c.b16 %v303, %v303
    %v320 = vpack.c.b16 %v304, %v304
    %v321 = vpack.c.b16 %v305, %v305
    %v322 = vpack.c.b16 %v306, %v306
    %v323 = vpack.c.b16 %v307, %v307
    %v324 = vpack.c.b16 %v308, %v308
    %v325 = vpack.c.b16 %v309, %v309
    %v326 = vpack.c.b16 %v310, %v310
    %v327 = vpack.c.b16 %v311, %v311
    %v328 = vpack.c.b16 %v312, %v312
    %v329 = vpack.c.b16 %v313, %v313
    %v330 = vpack.c.b16 %v314, %v314
    %v331 = vpack.c.b16 %v315, %v315
    %348 = vst [vmem:[#allocation8] sm:$0xf] %v316
    %349 = vst [vmem:[#allocation8 + $0x4] sm:$0xf] %v317
    %350 = vst [vmem:[#allocation8 + $0x8] sm:$0xf] %v318
    %351 = vst [vmem:[#allocation8 + $0xc] sm:$0xf] %v319
    %352 = vst [vmem:[#allocation8 + $0x10] sm:$0xf] %v320
    %353 = vst [vmem:[#allocation8 + $0x14] sm:$0xf] %v321
    %354 = vst [vmem:[#allocation8 + $0x18] sm:$0xf] %v322
    %355 = vst [vmem:[#allocation8 + $0x1c] sm:$0xf] %v323
    %356 = vst [vmem:[#allocation8 + $0x20] sm:$0xf] %v324
    %357 = vst [vmem:[#allocation8 + $0x24] sm:$0xf] %v325
    %358 = vst [vmem:[#allocation8 + $0x28] sm:$0xf] %v326
    %359 = vst [vmem:[#allocation8 + $0x2c] sm:$0xf] %v327
    %360 = vst [vmem:[#allocation8 + $0x30] sm:$0xf] %v328
    %361 = vst [vmem:[#allocation8 + $0x34] sm:$0xf] %v329
    %362 = vst [vmem:[#allocation8 + $0x38] sm:$0xf] %v330
    %363 = vst [vmem:[#allocation8 + $0x3c] sm:$0xf] %v331
    %380 = vrot.lane.b32.xlu0 %v222, 96
    %v381 = vpop.permute.xlu0 %380
    %382 = vrot.lane.b32.xlu0 %v225, 96
    %v383 = vpop.permute.xlu0 %382
    %384 = vrot.lane.b32.xlu0 %v230, 96
    %v385 = vpop.permute.xlu0 %384
    %386 = vrot.lane.b32.xlu0 %v233, 96
    %v387 = vpop.permute.xlu0 %386
    %388 = vrot.lane.b32.xlu0 %v238, 96
    %v389 = vpop.permute.xlu0 %388
    %390 = vrot.lane.b32.xlu0 %v241, 96
    %v391 = vpop.permute.xlu0 %390
    %392 = vrot.lane.b32.xlu0 %v246, 96
    %v393 = vpop.permute.xlu0 %392
    %394 = vrot.lane.b32.xlu0 %v249, 96
    %v395 = vpop.permute.xlu0 %394
    %396 = vrot.lane.b32.xlu0 %v254, 96
    %v397 = vpop.permute.xlu0 %396
    %398 = vrot.lane.b32.xlu0 %v257, 96
    %v399 = vpop.permute.xlu0 %398
    %400 = vrot.lane.b32.xlu0 %v262, 96
    %v401 = vpop.permute.xlu0 %400
    %402 = vrot.lane.b32.xlu0 %v265, 96
    %v403 = vpop.permute.xlu0 %402
    %404 = vrot.lane.b32.xlu0 %v270, 96
    %v405 = vpop.permute.xlu0 %404
    %406 = vrot.lane.b32.xlu0 %v273, 96
    %v407 = vpop.permute.xlu0 %406
    %408 = vrot.lane.b32.xlu0 %v278, 96
    %v409 = vpop.permute.xlu0 %408
    %410 = vrot.lane.b32.xlu0 %v281, 96
    %v411 = vpop.permute.xlu0 %410
    %vm428 = vcmask 7168
    %429 = vst.msk [vmem:[#allocation9] sm:$0xff] %vm428, %v381
    %430 = vst.msk [vmem:[#allocation9 + $0x8] sm:$0xff] %vm428, %v383
    %431 = vst.msk [vmem:[#allocation9 + $0x10] sm:$0xff] %vm428, %v385
    %432 = vst.msk [vmem:[#allocation9 + $0x18] sm:$0xff] %vm428, %v387
    %433 = vst.msk [vmem:[#allocation9 + $0x20] sm:$0xff] %vm428, %v389
    %434 = vst.msk [vmem:[#allocation9 + $0x28] sm:$0xff] %vm428, %v391
    %435 = vst.msk [vmem:[#allocation9 + $0x30] sm:$0xff] %vm428, %v393
    %436 = vst.msk [vmem:[#allocation9 + $0x38] sm:$0xff] %vm428, %v395
    %437 = vst.msk [vmem:[#allocation9 + $0x40] sm:$0xff] %vm428, %v397
    %438 = vst.msk [vmem:[#allocation9 + $0x48] sm:$0xff] %vm428, %v399
    %439 = vst.msk [vmem:[#allocation9 + $0x50] sm:$0xff] %vm428, %v401
    %440 = vst.msk [vmem:[#allocation9 + $0x58] sm:$0xff] %vm428, %v403
    %441 = vst.msk [vmem:[#allocation9 + $0x60] sm:$0xff] %vm428, %v405
    %442 = vst.msk [vmem:[#allocation9 + $0x68] sm:$0xff] %vm428, %v407
    %443 = vst.msk [vmem:[#allocation9 + $0x70] sm:$0xff] %vm428, %v409
    %444 = vst.msk [vmem:[#allocation9 + $0x78] sm:$0xff] %vm428, %v411
    %v445 = vld [vmem:[#allocation7] sm:$0x1]
    %v446 = vld [vmem:[#allocation2] sm:$0xf]
    %v447 = vld [vmem:[#allocation2 + $0x4] sm:$0xf]
    %v448 = vld [vmem:[#allocation2 + $0x8] sm:$0xf]
    %v449 = vld [vmem:[#allocation2 + $0xc] sm:$0xf]
    %v450 = vld [vmem:[#allocation2 + $0x10] sm:$0xf]
    %v451 = vld [vmem:[#allocation2 + $0x14] sm:$0xf]
    %v452 = vld [vmem:[#allocation2 + $0x18] sm:$0xf]
    %v453 = vld [vmem:[#allocation2 + $0x1c] sm:$0xf]
    %v454 = vld [vmem:[#allocation2 + $0x20] sm:$0xf]
    %v455 = vld [vmem:[#allocation2 + $0x24] sm:$0xf]
    %v456 = vld [vmem:[#allocation2 + $0x28] sm:$0xf]
    %v457 = vld [vmem:[#allocation2 + $0x2c] sm:$0xf]
    %v458 = vld [vmem:[#allocation2 + $0x30] sm:$0xf]
    %v459 = vld [vmem:[#allocation2 + $0x34] sm:$0xf]
    %v460 = vld [vmem:[#allocation2 + $0x38] sm:$0xf]
    %v461 = vld [vmem:[#allocation2 + $0x3c] sm:$0xf]
    %v478 = vunpack.c.l.b16 %v446
    %v479 = vunpack.c.l.b16 %v447
    %v480 = vunpack.c.l.b16 %v448
    %v481 = vunpack.c.l.b16 %v449
    %v482 = vunpack.c.l.b16 %v450
    %v483 = vunpack.c.l.b16 %v451
    %v484 = vunpack.c.l.b16 %v452
    %v485 = vunpack.c.l.b16 %v453
    %v486 = vunpack.c.l.b16 %v454
    %v487 = vunpack.c.l.b16 %v455
    %v488 = vunpack.c.l.b16 %v456
    %v489 = vunpack.c.l.b16 %v457
    %v490 = vunpack.c.l.b16 %v458
    %v491 = vunpack.c.l.b16 %v459
    %v492 = vunpack.c.l.b16 %v460
    %v493 = vunpack.c.l.b16 %v461
    %v494 = vpack.c.b16 %v479, %v478
    %v495 = vpack.c.b16 %v481, %v480
    %v496 = vpack.c.b16 %v483, %v482
    %v497 = vpack.c.b16 %v485, %v484
    %v498 = vpack.c.b16 %v487, %v486
    %v499 = vpack.c.b16 %v489, %v488
    %v500 = vpack.c.b16 %v491, %v490
    %v501 = vpack.c.b16 %v493, %v492
    %510 = vmatprep.subr.bf16.mxu0 0
    %511 = vmatpush1.bf16.xpose.msra.mxu0 %v494
    %512 = vmatprep.subr.bf16.mxu0 0
    %513 = vmatpush1.bf16.xpose.msra.mxu0 %v495
    %514 = vmatprep.subr.bf16.mxu0 0
    %515 = vmatpush1.bf16.xpose.msra.mxu0 %v496
    %516 = vmatprep.subr.bf16.mxu0 0
    %517 = vmatpush1.bf16.xpose.msra.mxu0 %v497
    %518 = vmatprep.subr.bf16.mxu0 0
    %519 = vmatpush1.bf16.xpose.msra.mxu0 %v498
    %520 = vmatprep.subr.bf16.mxu0 0
    %521 = vmatpush1.bf16.xpose.msra.mxu0 %v499
    %522 = vmatprep.subr.bf16.mxu0 0
    %523 = vmatpush1.bf16.xpose.msra.mxu0 %v500
    %524 = vmatprep.subr.bf16.mxu0 0
    %525 = vmatpush1.bf16.xpose.msra.mxu0 %v501
    %526 = vmatprep.subr.bf16.mxu0 0
    %527 = vmatpush1.bf16.xpose.msra.mxu0 0
    %528 = vmatprep.subr.bf16.mxu0 0
    %529 = vmatpush1.bf16.xpose.msra.mxu0 0
    %530 = vmatprep.subr.bf16.mxu0 0
    %531 = vmatpush1.bf16.xpose.msra.mxu0 0
    %532 = vmatprep.subr.bf16.mxu0 0
    %533 = vmatpush1.bf16.xpose.msra.mxu0 0
    %534 = vmatprep.subr.bf16.mxu0 0
    %535 = vmatpush1.bf16.xpose.msra.mxu0 0
    %536 = vmatprep.subr.bf16.mxu0 0
    %537 = vmatpush1.bf16.xpose.msra.mxu0 0
    %538 = vmatprep.subr.bf16.mxu0 0
    %539 = vmatpush1.bf16.xpose.msra.mxu0 0
    %540 = vmatprep.subr.bf16.mxu0 0
    %541 = vmatpush1.bf16.xpose.msra.mxu0 0
    %542 = vmatprep.mubr.bf16.mxu0 0
    %543 = vmatmul.mubr.bf16.gmra.mrb[0].mxu0 %v445
    %v544 = vpop.f32.mrb[0].mxu0
    %v545 = vadd.f32 0.0, %v544
    %v546 = vpop.f32.mrb[0].mxu0
    %v547 = vpop.f32.mrb[0].mxu0
    %v548 = vpop.f32.mrb[0].mxu0
    %549 = vdwg.mxu0
    %550 = vst [vmem:[#allocation11] sm:$0x1] %v545
    // Predicated region
    $region26: #{tpu_custom_call.1} parent=1 // pred_check
      _
    $region27: #{tpu_custom_call.1} parent=1 // pred_check_branch
      %552 = sbr.rel (0) target = $region29
    $region28: #{tpu_custom_call.1} parent=1 // pred_region
      %s554 = ssub.s32 1024, 1024
      %555 = vsyncadd [#allocation4], %s554
      %s556 = sshll.u32 [#allocation8], 4
      %s557 = int_to_ptr.vmem [resolvable:$true] %s556
      %562 = dma.vmem_to_hbm [thread:$0]  %s557, 1024, %s3, [#allocation4], 64, 64, 4
    $region29: #{tpu_custom_call.1} parent=1 // pred_fallthru
      _
    // Predicated region
    $region30: #{tpu_custom_call.1} parent=1 // pred_check
      _
    $region31: #{tpu_custom_call.1} parent=1 // pred_check_branch
      %564 = sbr.rel (0) target = $region33
    $region32: #{tpu_custom_call.1} parent=1 // pred_region
      %s566 = ssub.s32 2048, 2048
      %567 = vsyncadd [#allocation10], %s566
      %s568 = sshll.u32 [#allocation9], 4
      %s569 = int_to_ptr.vmem [resolvable:$true] %s568
      %574 = dma.vmem_to_hbm [thread:$0]  %s569, 2048, %s4, [#allocation10], 128, 128, 8
    $region33: #{tpu_custom_call.1} parent=1 // pred_fallthru
      _
    // Predicated region
    $region34: #{tpu_custom_call.1} parent=1 // pred_check
      _
    $region35: #{tpu_custom_call.1} parent=1 // pred_check_branch
      %576 = sbr.rel (0) target = $region37
    $region36: #{tpu_custom_call.1} parent=1 // pred_region
      %s578 = ssub.s32 16, 16
      %579 = vsyncadd [#allocation10], %s578
      %s581 = sshll.u32 [#allocation11], 4
      %s582 = int_to_ptr.vmem [resolvable:$true] %s581
      %584 = dma.vmem_to_hbm [thread:$0]  %s582, 16, %s5, [#allocation10]
    $region37: #{tpu_custom_call.1} parent=1 // pred_fallthru
      _
    // Predicated region
    $region38: #{tpu_custom_call.1} parent=1 // pred_check
      _
    $region39: #{tpu_custom_call.1} parent=1 // pred_check_branch
      %586 = sbr.rel (0) target = $region41
    $region40: #{tpu_custom_call.1} parent=1 // pred_region
      %587 = dma.done [#allocation4], 1024
    $region41: #{tpu_custom_call.1} parent=1 // pred_fallthru
      _
    // Predicated region
    $region42: #{tpu_custom_call.1} parent=1 // pred_check
      _
    $region43: #{tpu_custom_call.1} parent=1 // pred_check_branch
      %589 = sbr.rel (0) target = $region45
    $region44: #{tpu_custom_call.1} parent=1 // pred_region
      %590 = dma.done [#allocation10], 2048
    $region45: #{tpu_custom_call.1} parent=1 // pred_fallthru
      _
    // Predicated region
    $region46: #{tpu_custom_call.1} parent=1 // pred_check
      _
    $region47: #{tpu_custom_call.1} parent=1 // pred_check_branch
      %592 = sbr.rel (0) target = $region49
    $region48: #{tpu_custom_call.1} parent=1 // pred_region
      %593 = dma.done [#allocation10], 16
    $region49: #{tpu_custom_call.1} parent=1 // pred_fallthru
      _
    %594 = vsyncpa [#allocation3], 1
    %595 = vsyncpa [#allocation6], 1
    %596 = vsyncpa [#allocation4], 1
    %597 = vsyncpa [#allocation10], 1

</llo_original>
